<compile_context>
chip_gen: v5e
topology: v5e:2x2
jax: 0.10.0
libtpu: 0.0.40
codegen_flags: <defaults>
</compile_context>

<pallas_src>
import jax
import jax.numpy as jnp
from jax.experimental import pallas as pl
from jax.experimental.pallas import tpu as pltpu

# ---- module hyper-parameters (synthetic, deterministic) ---------------------
B = 2                       # batch
N = 8                       # number of tokens
C = 32                      # embedding dim
NUM_HEADS = 2
HEAD_DIM = C // NUM_HEADS
SCALE = HEAD_DIM ** (-0.5)  # qk_scale=None -> head_dim ** -0.5
BN = B * N                  # flattened rows


def _self_attention_kernel(x_ref, wq_ref, wk_ref, wv_ref, wp_ref, bproj_ref, o_ref):
    # x_ref:     (B*N, C)       whole batch, tokens flattened into rows (f32)
    # wq_ref:    (H, C, Hd)     per-head q weight, pre-scaled by SCALE
    # wk_ref:    (H, C, Hd)     per-head k weight
    # wv_ref:    (H, C, Hd)     per-head v weight
    # wp_ref:    (H, Hd, C)     proj weight split along its input dim per head
    # bproj_ref: (1, C)         proj bias
    # o_ref:     (B*N, C)
    x = x_ref[...]
    bias = bproj_ref[...]                                   # hoisted: load once

    # Static loops over (batch, head): B*H = 4 tiny, fully unrolled iterations.
    for b in range(B):
        xb = x[b * N:(b + 1) * N, :]                        # (N, C) sublane-aligned
        acc = None
        for h in range(NUM_HEADS):
            # Per-head projections: lane-aligned (N, Hd) results, no slicing.
            qh = jnp.dot(xb, wq_ref[h], preferred_element_type=jnp.float32)
            kh = jnp.dot(xb, wk_ref[h], preferred_element_type=jnp.float32)
            vh = jnp.dot(xb, wv_ref[h], preferred_element_type=jnp.float32)

            # Scores: contract last dims of q and k directly (no kh.T value).
            s = jax.lax.dot_general(
                qh, kh,
                dimension_numbers=(((1,), (1,)), ((), ())),
                preferred_element_type=jnp.float32)          # (N, N)
            s = s - jnp.max(s, axis=-1, keepdims=True)
            p = jnp.exp(s)
            p = p * pl.reciprocal(jnp.sum(p, axis=-1, keepdims=True), approx=True)

            oh = jnp.dot(p, vh, preferred_element_type=jnp.float32)       # (N, Hd)
            # Fold this head straight into the output projection; accumulate
            # in registers (replaces the VMEM scratch + narrow masked stores).
            contrib = jnp.dot(oh, wp_ref[h], preferred_element_type=jnp.float32)  # (N, C)
            acc = contrib if acc is None else acc + contrib

        # One full-width, sublane-aligned store per batch.
        o_ref[b * N:(b + 1) * N, :] = (acc + bias).astype(o_ref.dtype)


def prepare_params(w_qkv, w_proj, b_proj):
    """One-time weight prep: per-head split, x@W layout, fold softmax scale.

    PyTorch layouts: w_qkv (3C, C), w_proj (C, C), b_proj (C,); Linear computes
    x @ W.T.  The 3C output features split as [3, H, Hd].
    """
    w_qkv = w_qkv.astype(jnp.float32)
    w_proj = w_proj.astype(jnp.float32)

    def per_head(w_block):                                   # (C, C) torch rows
        # rows h*Hd:(h+1)*Hd are head h's output features -> (H, C, Hd) for x@W
        return jnp.transpose(w_block.reshape(NUM_HEADS, HEAD_DIM, C), (0, 2, 1))

    wq3 = per_head(w_qkv[0 * C:1 * C]) * SCALE               # fold scale into q
    wk3 = per_head(w_qkv[1 * C:2 * C])
    wv3 = per_head(w_qkv[2 * C:3 * C])
    # proj: y @ w_proj.T, split along y's (input) columns per head -> (H, Hd, C)
    wp3 = jnp.transpose(w_proj.reshape(C, NUM_HEADS, HEAD_DIM), (1, 2, 0))
    bproj2d = b_proj.reshape(1, C).astype(jnp.float32)
    return wq3, wk3, wv3, wp3, bproj2d


@jax.jit
def self_attention(x, wq3, wk3, wv3, wp3, bproj2d):
    """x: (B, N, C). Weights from prepare_params(). Returns (B, N, C) f32."""
    x2d = x.astype(jnp.float32).reshape(BN, C)   # force_fp32 + free row-major flatten

    out2d = pl.pallas_call(
        _self_attention_kernel,
        out_shape=jax.ShapeDtypeStruct((BN, C), jnp.float32),
        grid_spec=pltpu.PrefetchScalarGridSpec(
            num_scalar_prefetch=0,
            grid=(1,),                                   # single invocation
            in_specs=[
                pl.BlockSpec((BN, C), lambda i: (0, 0)),
                pl.BlockSpec((NUM_HEADS, C, HEAD_DIM), lambda i: (0, 0, 0)),
                pl.BlockSpec((NUM_HEADS, C, HEAD_DIM), lambda i: (0, 0, 0)),
                pl.BlockSpec((NUM_HEADS, C, HEAD_DIM), lambda i: (0, 0, 0)),
                pl.BlockSpec((NUM_HEADS, HEAD_DIM, C), lambda i: (0, 0, 0)),
                pl.BlockSpec((1, C), lambda i: (0, 0)),
            ],
            out_specs=pl.BlockSpec((BN, C), lambda i: (0, 0)),
        ),
        compiler_params=pltpu.CompilerParams(
            dimension_semantics=("arbitrary",)),
    )(x2d, wq3, wk3, wv3, wp3, bproj2d)

    return out2d.reshape(B, N, C)


def _reference(x, w_qkv, w_proj, b_proj):
    """Pure-JAX reference mirroring the PyTorch forward."""
    x = x.astype(jnp.float32)
    Bq, Nq, Cq = x.shape
    qkv = x @ w_qkv.T                                   # (B, N, 3C)  (no qkv bias)
    qkv = qkv.reshape(Bq, Nq, 3, NUM_HEADS, Cq // NUM_HEADS)
    qkv = jnp.transpose(qkv, (2, 0, 3, 1, 4))           # (3, B, H, N, Hd)
    q, k, v = qkv[0], qkv[1], qkv[2]
    attn = (q @ jnp.swapaxes(k, -2, -1)) * SCALE        # (B, H, N, N)
    attn = jax.nn.softmax(attn, axis=-1)
    out = attn @ v                                      # (B, H, N, Hd)
    out = jnp.transpose(out, (0, 2, 1, 3)).reshape(Bq, Nq, Cq)
    return out @ w_proj.T + b_proj


if __name__ == "__main__":
    key = jax.random.PRNGKey(0)
    kx, kqkv, kproj, kb = jax.random.split(key, 4)

    x = jax.random.normal(kx, (B, N, C), dtype=jnp.float32)
    # torch nn.Linear weight layouts: qkv (3C, C), proj (C, C), proj bias (C,)
    w_qkv = 0.1 * jax.random.normal(kqkv, (3 * C, C), dtype=jnp.float32)
    w_proj = 0.1 * jax.random.normal(kproj, (C, C), dtype=jnp.float32)
    b_proj = 0.01 * jax.random.normal(kb, (C,), dtype=jnp.float32)

    # One-time weight preparation (hoisted out of the per-call path).
    params = prepare_params(w_qkv, w_proj, b_proj)

    out = self_attention(x, *params)
    out = jax.block_until_ready(out)

    ref = _reference(x, w_qkv, w_proj, b_proj)
    assert out.shape == (B, N, C)
    # approx=True reciprocal contributes ~1e-5-level error; tolerance covers it.
    assert jnp.allclose(out, ref, atol=1e-3, rtol=1e-3), "mismatch vs reference"

    print("KERNEL_OK")
</pallas_src>

<mosaic_0001>
module attributes {stable_mosaic.version = 11 : i64} {
  func.func @_self_attention_kernel(%arg0: i32, %arg1: memref<16x32xf32, #tpu.memory_space<vmem>>, %arg2: memref<2x32x16xf32, #tpu.memory_space<vmem>>, %arg3: memref<2x32x16xf32, #tpu.memory_space<vmem>>, %arg4: memref<2x32x16xf32, #tpu.memory_space<vmem>>, %arg5: memref<2x16x32xf32, #tpu.memory_space<vmem>>, %arg6: memref<1x32xf32, #tpu.memory_space<vmem>>, %arg7: memref<16x32xf32, #tpu.memory_space<vmem>>) attributes {dimension_semantics = [#tpu.dimension_semantics<arbitrary>], iteration_bounds = array<i64: 1>, scalar_prefetch = 0 : i64, scratch_operands = 0 : i64, tpu.core_type = #tpu.core_type<tc>, window_params = [{pipeline_mode = #tpu.pipeline_mode<synchronous>, transform_indices = @transform_0, window_bounds = array<i64: 16, 32>}, {pipeline_mode = #tpu.pipeline_mode<synchronous>, transform_indices = @transform_1, window_bounds = array<i64: 2, 32, 16>}, {pipeline_mode = #tpu.pipeline_mode<synchronous>, transform_indices = @transform_2, window_bounds = array<i64: 2, 32, 16>}, {pipeline_mode = #tpu.pipeline_mode<synchronous>, transform_indices = @transform_3, window_bounds = array<i64: 2, 32, 16>}, {pipeline_mode = #tpu.pipeline_mode<synchronous>, transform_indices = @transform_4, window_bounds = array<i64: 2, 16, 32>}, {pipeline_mode = #tpu.pipeline_mode<synchronous>, transform_indices = @transform_5, window_bounds = array<i64: 1, 32>}, {pipeline_mode = #tpu.pipeline_mode<synchronous>, transform_indices = @transform_6, window_bounds = array<i64: 16, 32>}]} {
    %c0 = arith.constant 0 : index
    %c0_0 = arith.constant 0 : index
    %0 = vector.load %arg1[%c0, %c0_0] : memref<16x32xf32, #tpu.memory_space<vmem>>, vector<16x32xf32>
    %c0_1 = arith.constant 0 : index
    %c0_2 = arith.constant 0 : index
    %1 = vector.load %arg6[%c0_1, %c0_2] : memref<1x32xf32, #tpu.memory_space<vmem>>, vector<1x32xf32>
    %2 = vector.extract_strided_slice %0 {offsets = [0, 0], sizes = [8, 32], strides = [1, 1]} : vector<16x32xf32> to vector<8x32xf32>
    %c0_3 = arith.constant 0 : index
    %c0_4 = arith.constant 0 : index
    %c0_5 = arith.constant 0 : index
    %3 = vector.load %arg2[%c0_3, %c0_4, %c0_5] : memref<2x32x16xf32, #tpu.memory_space<vmem>>, vector<1x32x16xf32>
    %4 = vector.shape_cast %3 : vector<1x32x16xf32> to vector<32x16xf32>
    %cst = arith.constant dense<0.000000e+00> : vector<8x16xf32>
    %5 = tpu.matmul %2, %4, %cst {dimension_numbers = #tpu.dot_dimension_numbers<[1], [0], [0], [1], [0, 0, 1, 1], [], []>} : vector<8x32xf32>, vector<32x16xf32>, vector<8x16xf32> -> vector<8x16xf32>
    %c0_6 = arith.constant 0 : index
    %c0_7 = arith.constant 0 : index
    %c0_8 = arith.constant 0 : index
    %6 = vector.load %arg3[%c0_6, %c0_7, %c0_8] : memref<2x32x16xf32, #tpu.memory_space<vmem>>, vector<1x32x16xf32>
    %7 = vector.shape_cast %6 : vector<1x32x16xf32> to vector<32x16xf32>
    %cst_9 = arith.constant dense<0.000000e+00> : vector<8x16xf32>
    %8 = tpu.matmul %2, %7, %cst_9 {dimension_numbers = #tpu.dot_dimension_numbers<[1], [0], [0], [1], [0, 0, 1, 1], [], []>} : vector<8x32xf32>, vector<32x16xf32>, vector<8x16xf32> -> vector<8x16xf32>
    %c0_10 = arith.constant 0 : index
    %c0_11 = arith.constant 0 : index
    %c0_12 = arith.constant 0 : index
    %9 = vector.load %arg4[%c0_10, %c0_11, %c0_12] : memref<2x32x16xf32, #tpu.memory_space<vmem>>, vector<1x32x16xf32>
    %10 = vector.shape_cast %9 : vector<1x32x16xf32> to vector<32x16xf32>
    %cst_13 = arith.constant dense<0.000000e+00> : vector<8x16xf32>
    %11 = tpu.matmul %2, %10, %cst_13 {dimension_numbers = #tpu.dot_dimension_numbers<[1], [0], [0], [1], [0, 0, 1, 1], [], []>} : vector<8x32xf32>, vector<32x16xf32>, vector<8x16xf32> -> vector<8x16xf32>
    %cst_14 = arith.constant dense<0.000000e+00> : vector<8x8xf32>
    %12 = tpu.matmul %5, %8, %cst_14 {dimension_numbers = #tpu.dot_dimension_numbers<[1], [1], [0], [0], [0, 0, 1, 0], [], []>} : vector<8x16xf32>, vector<8x16xf32>, vector<8x8xf32> -> vector<8x8xf32>
    %cst_15 = arith.constant dense<0xFF800000> : vector<8xf32>
    %13 = vector.multi_reduction <maximumf>, %12, %cst_15 [1] : vector<8x8xf32> to vector<8xf32>
    %14 = vector.shape_cast %13 : vector<8xf32> to vector<8x1xf32>
    %15 = vector.broadcast %14 : vector<8x1xf32> to vector<8x8xf32>
    %16 = arith.subf %12, %15 : vector<8x8xf32>
    %17 = math.exp %16 : vector<8x8xf32>
    %cst_16 = arith.constant dense<0.000000e+00> : vector<8xf32>
    %18 = vector.multi_reduction <add>, %17, %cst_16 [1] : vector<8x8xf32> to vector<8xf32>
    %19 = vector.shape_cast %18 : vector<8xf32> to vector<8x1xf32>
    %20 = tpu.reciprocal %19 {approx = true} : vector<8x1xf32> -> vector<8x1xf32>
    %21 = vector.broadcast %20 : vector<8x1xf32> to vector<8x8xf32>
    %22 = arith.mulf %17, %21 : vector<8x8xf32>
    %cst_17 = arith.constant dense<0.000000e+00> : vector<8x16xf32>
    %23 = tpu.matmul %22, %11, %cst_17 {dimension_numbers = #tpu.dot_dimension_numbers<[1], [0], [0], [1], [0, 0, 1, 1], [], []>} : vector<8x8xf32>, vector<8x16xf32>, vector<8x16xf32> -> vector<8x16xf32>
    %c0_18 = arith.constant 0 : index
    %c0_19 = arith.constant 0 : index
    %c0_20 = arith.constant 0 : index
    %24 = vector.load %arg5[%c0_18, %c0_19, %c0_20] : memref<2x16x32xf32, #tpu.memory_space<vmem>>, vector<1x16x32xf32>
    %25 = vector.shape_cast %24 : vector<1x16x32xf32> to vector<16x32xf32>
    %cst_21 = arith.constant dense<0.000000e+00> : vector<8x32xf32>
    %26 = tpu.matmul %23, %25, %cst_21 {dimension_numbers = #tpu.dot_dimension_numbers<[1], [0], [0], [1], [0, 0, 1, 1], [], []>} : vector<8x16xf32>, vector<16x32xf32>, vector<8x32xf32> -> vector<8x32xf32>
    %c1 = arith.constant 1 : index
    %c0_22 = arith.constant 0 : index
    %c0_23 = arith.constant 0 : index
    %27 = vector.load %arg2[%c1, %c0_22, %c0_23] : memref<2x32x16xf32, #tpu.memory_space<vmem>>, vector<1x32x16xf32>
    %28 = vector.shape_cast %27 : vector<1x32x16xf32> to vector<32x16xf32>
    %cst_24 = arith.constant dense<0.000000e+00> : vector<8x16xf32>
    %29 = tpu.matmul %2, %28, %cst_24 {dimension_numbers = #tpu.dot_dimension_numbers<[1], [0], [0], [1], [0, 0, 1, 1], [], []>} : vector<8x32xf32>, vector<32x16xf32>, vector<8x16xf32> -> vector<8x16xf32>
    %c1_25 = arith.constant 1 : index
    %c0_26 = arith.constant 0 : index
    %c0_27 = arith.constant 0 : index
    %30 = vector.load %arg3[%c1_25, %c0_26, %c0_27] : memref<2x32x16xf32, #tpu.memory_space<vmem>>, vector<1x32x16xf32>
    %31 = vector.shape_cast %30 : vector<1x32x16xf32> to vector<32x16xf32>
    %cst_28 = arith.constant dense<0.000000e+00> : vector<8x16xf32>
    %32 = tpu.matmul %2, %31, %cst_28 {dimension_numbers = #tpu.dot_dimension_numbers<[1], [0], [0], [1], [0, 0, 1, 1], [], []>} : vector<8x32xf32>, vector<32x16xf32>, vector<8x16xf32> -> vector<8x16xf32>
    %c1_29 = arith.constant 1 : index
    %c0_30 = arith.constant 0 : index
    %c0_31 = arith.constant 0 : index
    %33 = vector.load %arg4[%c1_29, %c0_30, %c0_31] : memref<2x32x16xf32, #tpu.memory_space<vmem>>, vector<1x32x16xf32>
    %34 = vector.shape_cast %33 : vector<1x32x16xf32> to vector<32x16xf32>
    %cst_32 = arith.constant dense<0.000000e+00> : vector<8x16xf32>
    %35 = tpu.matmul %2, %34, %cst_32 {dimension_numbers = #tpu.dot_dimension_numbers<[1], [0], [0], [1], [0, 0, 1, 1], [], []>} : vector<8x32xf32>, vector<32x16xf32>, vector<8x16xf32> -> vector<8x16xf32>
    %cst_33 = arith.constant dense<0.000000e+00> : vector<8x8xf32>
    %36 = tpu.matmul %29, %32, %cst_33 {dimension_numbers = #tpu.dot_dimension_numbers<[1], [1], [0], [0], [0, 0, 1, 0], [], []>} : vector<8x16xf32>, vector<8x16xf32>, vector<8x8xf32> -> vector<8x8xf32>
    %cst_34 = arith.constant dense<0xFF800000> : vector<8xf32>
    %37 = vector.multi_reduction <maximumf>, %36, %cst_34 [1] : vector<8x8xf32> to vector<8xf32>
    %38 = vector.shape_cast %37 : vector<8xf32> to vector<8x1xf32>
    %39 = vector.broadcast %38 : vector<8x1xf32> to vector<8x8xf32>
    %40 = arith.subf %36, %39 : vector<8x8xf32>
    %41 = math.exp %40 : vector<8x8xf32>
    %cst_35 = arith.constant dense<0.000000e+00> : vector<8xf32>
    %42 = vector.multi_reduction <add>, %41, %cst_35 [1] : vector<8x8xf32> to vector<8xf32>
    %43 = vector.shape_cast %42 : vector<8xf32> to vector<8x1xf32>
    %44 = tpu.reciprocal %43 {approx = true} : vector<8x1xf32> -> vector<8x1xf32>
    %45 = vector.broadcast %44 : vector<8x1xf32> to vector<8x8xf32>
    %46 = arith.mulf %41, %45 : vector<8x8xf32>
    %cst_36 = arith.constant dense<0.000000e+00> : vector<8x16xf32>
    %47 = tpu.matmul %46, %35, %cst_36 {dimension_numbers = #tpu.dot_dimension_numbers<[1], [0], [0], [1], [0, 0, 1, 1], [], []>} : vector<8x8xf32>, vector<8x16xf32>, vector<8x16xf32> -> vector<8x16xf32>
    %c1_37 = arith.constant 1 : index
    %c0_38 = arith.constant 0 : index
    %c0_39 = arith.constant 0 : index
    %48 = vector.load %arg5[%c1_37, %c0_38, %c0_39] : memref<2x16x32xf32, #tpu.memory_space<vmem>>, vector<1x16x32xf32>
    %49 = vector.shape_cast %48 : vector<1x16x32xf32> to vector<16x32xf32>
    %cst_40 = arith.constant dense<0.000000e+00> : vector<8x32xf32>
    %50 = tpu.matmul %47, %49, %cst_40 {dimension_numbers = #tpu.dot_dimension_numbers<[1], [0], [0], [1], [0, 0, 1, 1], [], []>} : vector<8x16xf32>, vector<16x32xf32>, vector<8x32xf32> -> vector<8x32xf32>
    %51 = arith.addf %26, %50 : vector<8x32xf32>
    %52 = vector.broadcast %1 : vector<1x32xf32> to vector<8x32xf32>
    %53 = arith.addf %51, %52 : vector<8x32xf32>
    %c0_41 = arith.constant 0 : index
    %c0_42 = arith.constant 0 : index
    %54 = vector.load %arg7[%c0_41, %c0_42] : memref<16x32xf32, #tpu.memory_space<vmem>>, vector<8x32xf32>
    tpu.vector_store %arg7[%c0_41, %c0_42], %53 {strides = array<i32>} : memref<16x32xf32, #tpu.memory_space<vmem>>, vector<8x32xf32>,
    %55 = vector.extract_strided_slice %0 {offsets = [8, 0], sizes = [8, 32], strides = [1, 1]} : vector<16x32xf32> to vector<8x32xf32>
    %c0_43 = arith.constant 0 : index
    %c0_44 = arith.constant 0 : index
    %c0_45 = arith.constant 0 : index
    %56 = vector.load %arg2[%c0_43, %c0_44, %c0_45] : memref<2x32x16xf32, #tpu.memory_space<vmem>>, vector<1x32x16xf32>
    %57 = vector.shape_cast %56 : vector<1x32x16xf32> to vector<32x16xf32>
    %cst_46 = arith.constant dense<0.000000e+00> : vector<8x16xf32>
    %58 = tpu.matmul %55, %57, %cst_46 {dimension_numbers = #tpu.dot_dimension_numbers<[1], [0], [0], [1], [0, 0, 1, 1], [], []>} : vector<8x32xf32>, vector<32x16xf32>, vector<8x16xf32> -> vector<8x16xf32>
    %c0_47 = arith.constant 0 : index
    %c0_48 = arith.constant 0 : index
    %c0_49 = arith.constant 0 : index
    %59 = vector.load %arg3[%c0_47, %c0_48, %c0_49] : memref<2x32x16xf32, #tpu.memory_space<vmem>>, vector<1x32x16xf32>
    %60 = vector.shape_cast %59 : vector<1x32x16xf32> to vector<32x16xf32>
    %cst_50 = arith.constant dense<0.000000e+00> : vector<8x16xf32>
    %61 = tpu.matmul %55, %60, %cst_50 {dimension_numbers = #tpu.dot_dimension_numbers<[1], [0], [0], [1], [0, 0, 1, 1], [], []>} : vector<8x32xf32>, vector<32x16xf32>, vector<8x16xf32> -> vector<8x16xf32>
    %c0_51 = arith.constant 0 : index
    %c0_52 = arith.constant 0 : index
    %c0_53 = arith.constant 0 : index
    %62 = vector.load %arg4[%c0_51, %c0_52, %c0_53] : memref<2x32x16xf32, #tpu.memory_space<vmem>>, vector<1x32x16xf32>
    %63 = vector.shape_cast %62 : vector<1x32x16xf32> to vector<32x16xf32>
    %cst_54 = arith.constant dense<0.000000e+00> : vector<8x16xf32>
    %64 = tpu.matmul %55, %63, %cst_54 {dimension_numbers = #tpu.dot_dimension_numbers<[1], [0], [0], [1], [0, 0, 1, 1], [], []>} : vector<8x32xf32>, vector<32x16xf32>, vector<8x16xf32> -> vector<8x16xf32>
    %cst_55 = arith.constant dense<0.000000e+00> : vector<8x8xf32>
    %65 = tpu.matmul %58, %61, %cst_55 {dimension_numbers = #tpu.dot_dimension_numbers<[1], [1], [0], [0], [0, 0, 1, 0], [], []>} : vector<8x16xf32>, vector<8x16xf32>, vector<8x8xf32> -> vector<8x8xf32>
    %cst_56 = arith.constant dense<0xFF800000> : vector<8xf32>
    %66 = vector.multi_reduction <maximumf>, %65, %cst_56 [1] : vector<8x8xf32> to vector<8xf32>
    %67 = vector.shape_cast %66 : vector<8xf32> to vector<8x1xf32>
    %68 = vector.broadcast %67 : vector<8x1xf32> to vector<8x8xf32>
    %69 = arith.subf %65, %68 : vector<8x8xf32>
    %70 = math.exp %69 : vector<8x8xf32>
    %cst_57 = arith.constant dense<0.000000e+00> : vector<8xf32>
    %71 = vector.multi_reduction <add>, %70, %cst_57 [1] : vector<8x8xf32> to vector<8xf32>
    %72 = vector.shape_cast %71 : vector<8xf32> to vector<8x1xf32>
    %73 = tpu.reciprocal %72 {approx = true} : vector<8x1xf32> -> vector<8x1xf32>
    %74 = vector.broadcast %73 : vector<8x1xf32> to vector<8x8xf32>
    %75 = arith.mulf %70, %74 : vector<8x8xf32>
    %cst_58 = arith.constant dense<0.000000e+00> : vector<8x16xf32>
    %76 = tpu.matmul %75, %64, %cst_58 {dimension_numbers = #tpu.dot_dimension_numbers<[1], [0], [0], [1], [0, 0, 1, 1], [], []>} : vector<8x8xf32>, vector<8x16xf32>, vector<8x16xf32> -> vector<8x16xf32>
    %c0_59 = arith.constant 0 : index
    %c0_60 = arith.constant 0 : index
    %c0_61 = arith.constant 0 : index
    %77 = vector.load %arg5[%c0_59, %c0_60, %c0_61] : memref<2x16x32xf32, #tpu.memory_space<vmem>>, vector<1x16x32xf32>
    %78 = vector.shape_cast %77 : vector<1x16x32xf32> to vector<16x32xf32>
    %cst_62 = arith.constant dense<0.000000e+00> : vector<8x32xf32>
    %79 = tpu.matmul %76, %78, %cst_62 {dimension_numbers = #tpu.dot_dimension_numbers<[1], [0], [0], [1], [0, 0, 1, 1], [], []>} : vector<8x16xf32>, vector<16x32xf32>, vector<8x32xf32> -> vector<8x32xf32>
    %c1_63 = arith.constant 1 : index
    %c0_64 = arith.constant 0 : index
    %c0_65 = arith.constant 0 : index
    %80 = vector.load %arg2[%c1_63, %c0_64, %c0_65] : memref<2x32x16xf32, #tpu.memory_space<vmem>>, vector<1x32x16xf32>
    %81 = vector.shape_cast %80 : vector<1x32x16xf32> to vector<32x16xf32>
    %cst_66 = arith.constant dense<0.000000e+00> : vector<8x16xf32>
    %82 = tpu.matmul %55, %81, %cst_66 {dimension_numbers = #tpu.dot_dimension_numbers<[1], [0], [0], [1], [0, 0, 1, 1], [], []>} : vector<8x32xf32>, vector<32x16xf32>, vector<8x16xf32> -> vector<8x16xf32>
    %c1_67 = arith.constant 1 : index
    %c0_68 = arith.constant 0 : index
    %c0_69 = arith.constant 0 : index
    %83 = vector.load %arg3[%c1_67, %c0_68, %c0_69] : memref<2x32x16xf32, #tpu.memory_space<vmem>>, vector<1x32x16xf32>
    %84 = vector.shape_cast %83 : vector<1x32x16xf32> to vector<32x16xf32>
    %cst_70 = arith.constant dense<0.000000e+00> : vector<8x16xf32>
    %85 = tpu.matmul %55, %84, %cst_70 {dimension_numbers = #tpu.dot_dimension_numbers<[1], [0], [0], [1], [0, 0, 1, 1], [], []>} : vector<8x32xf32>, vector<32x16xf32>, vector<8x16xf32> -> vector<8x16xf32>
    %c1_71 = arith.constant 1 : index
    %c0_72 = arith.constant 0 : index
    %c0_73 = arith.constant 0 : index
    %86 = vector.load %arg4[%c1_71, %c0_72, %c0_73] : memref<2x32x16xf32, #tpu.memory_space<vmem>>, vector<1x32x16xf32>
    %87 = vector.shape_cast %86 : vector<1x32x16xf32> to vector<32x16xf32>
    %cst_74 = arith.constant dense<0.000000e+00> : vector<8x16xf32>
    %88 = tpu.matmul %55, %87, %cst_74 {dimension_numbers = #tpu.dot_dimension_numbers<[1], [0], [0], [1], [0, 0, 1, 1], [], []>} : vector<8x32xf32>, vector<32x16xf32>, vector<8x16xf32> -> vector<8x16xf32>
    %cst_75 = arith.constant dense<0.000000e+00> : vector<8x8xf32>
    %89 = tpu.matmul %82, %85, %cst_75 {dimension_numbers = #tpu.dot_dimension_numbers<[1], [1], [0], [0], [0, 0, 1, 0], [], []>} : vector<8x16xf32>, vector<8x16xf32>, vector<8x8xf32> -> vector<8x8xf32>
    %cst_76 = arith.constant dense<0xFF800000> : vector<8xf32>
    %90 = vector.multi_reduction <maximumf>, %89, %cst_76 [1] : vector<8x8xf32> to vector<8xf32>
    %91 = vector.shape_cast %90 : vector<8xf32> to vector<8x1xf32>
    %92 = vector.broadcast %91 : vector<8x1xf32> to vector<8x8xf32>
    %93 = arith.subf %89, %92 : vector<8x8xf32>
    %94 = math.exp %93 : vector<8x8xf32>
    %cst_77 = arith.constant dense<0.000000e+00> : vector<8xf32>
    %95 = vector.multi_reduction <add>, %94, %cst_77 [1] : vector<8x8xf32> to vector<8xf32>
    %96 = vector.shape_cast %95 : vector<8xf32> to vector<8x1xf32>
    %97 = tpu.reciprocal %96 {approx = true} : vector<8x1xf32> -> vector<8x1xf32>
    %98 = vector.broadcast %97 : vector<8x1xf32> to vector<8x8xf32>
    %99 = arith.mulf %94, %98 : vector<8x8xf32>
    %cst_78 = arith.constant dense<0.000000e+00> : vector<8x16xf32>
    %100 = tpu.matmul %99, %88, %cst_78 {dimension_numbers = #tpu.dot_dimension_numbers<[1], [0], [0], [1], [0, 0, 1, 1], [], []>} : vector<8x8xf32>, vector<8x16xf32>, vector<8x16xf32> -> vector<8x16xf32>
    %c1_79 = arith.constant 1 : index
    %c0_80 = arith.constant 0 : index
    %c0_81 = arith.constant 0 : index
    %101 = vector.load %arg5[%c1_79, %c0_80, %c0_81] : memref<2x16x32xf32, #tpu.memory_space<vmem>>, vector<1x16x32xf32>
    %102 = vector.shape_cast %101 : vector<1x16x32xf32> to vector<16x32xf32>
    %cst_82 = arith.constant dense<0.000000e+00> : vector<8x32xf32>
    %103 = tpu.matmul %100, %102, %cst_82 {dimension_numbers = #tpu.dot_dimension_numbers<[1], [0], [0], [1], [0, 0, 1, 1], [], []>} : vector<8x16xf32>, vector<16x32xf32>, vector<8x32xf32> -> vector<8x32xf32>
    %104 = arith.addf %79, %103 : vector<8x32xf32>
    %105 = vector.broadcast %1 : vector<1x32xf32> to vector<8x32xf32>
    %106 = arith.addf %104, %105 : vector<8x32xf32>
    %c8 = arith.constant 8 : index
    %c0_83 = arith.constant 0 : index
    %107 = vector.load %arg7[%c8, %c0_83] : memref<16x32xf32, #tpu.memory_space<vmem>>, vector<8x32xf32>
    tpu.vector_store %arg7[%c8, %c0_83], %106 {strides = array<i32>} : memref<16x32xf32, #tpu.memory_space<vmem>>, vector<8x32xf32>,
    return
  }
  func.func @transform_0(%arg0: i32) -> (i32, i32) {
    %c0_i32 = arith.constant 0 : i32
    %c0_i32_0 = arith.constant 0 : i32
    %c0_i32_1 = arith.constant 0 : i32
    return %c0_i32, %c0_i32_0 : i32, i32
  }
  func.func @transform_1(%arg0: i32) -> (i32, i32, i32) {
    %c0_i32 = arith.constant 0 : i32
    %c0_i32_0 = arith.constant 0 : i32
    %c0_i32_1 = arith.constant 0 : i32
    %c0_i32_2 = arith.constant 0 : i32
    return %c0_i32, %c0_i32_0, %c0_i32_1 : i32, i32, i32
  }
  func.func @transform_2(%arg0: i32) -> (i32, i32, i32) {
    %c0_i32 = arith.constant 0 : i32
    %c0_i32_0 = arith.constant 0 : i32
    %c0_i32_1 = arith.constant 0 : i32
    %c0_i32_2 = arith.constant 0 : i32
    return %c0_i32, %c0_i32_0, %c0_i32_1 : i32, i32, i32
  }
  func.func @transform_3(%arg0: i32) -> (i32, i32, i32) {
    %c0_i32 = arith.constant 0 : i32
    %c0_i32_0 = arith.constant 0 : i32
    %c0_i32_1 = arith.constant 0 : i32
    %c0_i32_2 = arith.constant 0 : i32
    return %c0_i32, %c0_i32_0, %c0_i32_1 : i32, i32, i32
  }
  func.func @transform_4(%arg0: i32) -> (i32, i32, i32) {
    %c0_i32 = arith.constant 0 : i32
    %c0_i32_0 = arith.constant 0 : i32
    %c0_i32_1 = arith.constant 0 : i32
    %c0_i32_2 = arith.constant 0 : i32
    return %c0_i32, %c0_i32_0, %c0_i32_1 : i32, i32, i32
  }
  func.func @transform_5(%arg0: i32) -> (i32, i32) {
    %c0_i32 = arith.constant 0 : i32
    %c0_i32_0 = arith.constant 0 : i32
    %c0_i32_1 = arith.constant 0 : i32
    return %c0_i32, %c0_i32_0 : i32, i32
  }
  func.func @transform_6(%arg0: i32) -> (i32, i32) {
    %c0_i32 = arith.constant 0 : i32
    %c0_i32_0 = arith.constant 0 : i32
    %c0_i32_1 = arith.constant 0 : i32
    return %c0_i32, %c0_i32_0 : i32, i32
  }
}

</mosaic_0001>

<llo_original>
// kernel: self_attention.1
$region0: #{self_attention.1}
  #allocation0 [shape = 'u32[]', space=smem, size = 0x4, offset = 0x4, fixed_abs, tag = 'smem constant byte address 0x4 - core index']
  #allocation1 [shape = 'u32[72,128]{1,0:T(1,128)}', space=vmem, size = 0x9000, scoped, tag = 'internal scratch']
  %s0 = inlined_call_operand.vmem [shape: f32[16,32], index: 0, kind: input, shape index: {}]
  %s1 = inlined_call_operand.vmem [shape: f32[2,32,16], index: 1, kind: input, shape index: {}]
  %s2 = inlined_call_operand.vmem [shape: f32[2,32,16], index: 2, kind: input, shape index: {}]
  %s3 = inlined_call_operand.vmem [shape: f32[2,32,16], index: 3, kind: input, shape index: {}]
  %s4 = inlined_call_operand.vmem [shape: f32[2,16,32], index: 4, kind: input, shape index: {}]
  %s5 = inlined_call_operand.vmem [shape: f32[1,32], index: 5, kind: input, shape index: {}]
  %s6 = inlined_call_operand.hbm [shape: f32[16,32], index: 6, kind: output, shape index: {}]
  %s7 = sld [smem:[#allocation0]]
  $region34: #{self_attention.1} parent=0
    _
  %s9 = ssub.s32 1, %s7
  %s10 = scalar_select 0, %s9, %s7
  $region1: #{self_attention.1} parent=0
    #allocation2 [shape = 'u8[8192]{0}', space=vmem, size = 0x2000, scoped, tag = 'output window, operand 0, single buffered']
    #allocation3 [shape = 's32[1]{0}', space=sflag, size = 0x4, scoped, tag = 'scoped memory for self_attention.1']
    %11 = vsyncpa [#allocation3], 0
    // Predicated region
    $region2: #{self_attention.1} parent=1 // pred_check
      _
    $region3: #{self_attention.1} parent=1 // pred_check_branch
      %13 = sbr.rel (0) target = $region5
    $region4: #{self_attention.1} parent=1 // pred_region
      _
    $region5: #{self_attention.1} parent=1 // pred_fallthru
      _
    // Predicated region
    $region6: #{self_attention.1} parent=1 // pred_check
      _
    $region7: #{self_attention.1} parent=1 // pred_check_branch
      %15 = sbr.rel (0) target = $region9
    $region8: #{self_attention.1} parent=1 // pred_region
      _
    $region9: #{self_attention.1} parent=1 // pred_fallthru
      _
    // Predicated region
    $region10: #{self_attention.1} parent=1 // pred_check
      _
    $region11: #{self_attention.1} parent=1 // pred_check_branch
      %17 = sbr.rel (0) target = $region13
    $region12: #{self_attention.1} parent=1 // pred_region
      _
    $region13: #{self_attention.1} parent=1 // pred_fallthru
      _
    // Predicated region
    $region14: #{self_attention.1} parent=1 // pred_check
      _
    $region15: #{self_attention.1} parent=1 // pred_check_branch
      %19 = sbr.rel (0) target = $region17
    $region16: #{self_attention.1} parent=1 // pred_region
      _
    $region17: #{self_attention.1} parent=1 // pred_fallthru
      _
    // Predicated region
    $region18: #{self_attention.1} parent=1 // pred_check
      _
    $region19: #{self_attention.1} parent=1 // pred_check_branch
      %21 = sbr.rel (0) target = $region21
    $region20: #{self_attention.1} parent=1 // pred_region
      _
    $region21: #{self_attention.1} parent=1 // pred_fallthru
      _
    // Predicated region
    $region22: #{self_attention.1} parent=1 // pred_check
      _
    $region23: #{self_attention.1} parent=1 // pred_check_branch
      %23 = sbr.rel (0) target = $region25
    $region24: #{self_attention.1} parent=1 // pred_region
      _
    $region25: #{self_attention.1} parent=1 // pred_fallthru
      _
    %v24 = vld [vmem:[%s0] sm:$0xff]
    %v25 = vld [vmem:[%s0 + $0x8] sm:$0xff]
    %v26 = vld [vmem:[%s5] sm:$0x1]
    %v27 = vld [vmem:[%s1] sm:$0xff]
    %v28 = vld [vmem:[%s1 + $0x8] sm:$0xff]
    %v29 = vld [vmem:[%s1 + $0x10] sm:$0xff]
    %v30 = vld [vmem:[%s1 + $0x18] sm:$0xff]
    %vm31 = vcmask 261120
    %v33 = vsel %vm31, %v24, 0
    %35 = vmatpush.msra.mxu0 0.0
    %36 = vmatpush.msra.mxu0 0.0
    %37 = vmatpush.msra.mxu0 0.0
    %38 = vmatpush.msra.mxu0 0.0
    %39 = vmatpush.msra.mxu0 0.0
    %40 = vmatpush.msra.mxu0 0.0
    %41 = vmatpush.msra.mxu0 0.0
    %42 = vmatpush.msra.mxu0 0.0
    %43 = vmatpush.msra.mxu0 0.0
    %44 = vmatpush.msra.mxu0 0.0
    %45 = vmatpush.msra.mxu0 0.0
    %46 = vmatpush.msra.mxu0 0.0
    %47 = vmatpush.msra.mxu0 %v30
    %48 = vmatpush.msra.mxu0 %v29
    %49 = vmatpush.msra.mxu0 %v28
    %50 = vmatpush.msra.mxu0 %v27
    %51 = vmatmul.f32.gmra.mxu0 %v33
    %v52 = vpop.f32.mrf.mxu0
    %v53 = vadd.f32 0.0, %v52
    %54 = vdwg.mxu0
    %v55 = vld [vmem:[%s2] sm:$0xff]
    %v56 = vld [vmem:[%s2 + $0x8] sm:$0xff]
    %v57 = vld [vmem:[%s2 + $0x10] sm:$0xff]
    %v58 = vld [vmem:[%s2 + $0x18] sm:$0xff]
    %59 = vmatpush.msra.mxu0 0.0
    %60 = vmatpush.msra.mxu0 0.0
    %61 = vmatpush.msra.mxu0 0.0
    %62 = vmatpush.msra.mxu0 0.0
    %63 = vmatpush.msra.mxu0 0.0
    %64 = vmatpush.msra.mxu0 0.0
    %65 = vmatpush.msra.mxu0 0.0
    %66 = vmatpush.msra.mxu0 0.0
    %67 = vmatpush.msra.mxu0 0.0
    %68 = vmatpush.msra.mxu0 0.0
    %69 = vmatpush.msra.mxu0 0.0
    %70 = vmatpush.msra.mxu0 0.0
    %71 = vmatpush.msra.mxu0 %v58
    %72 = vmatpush.msra.mxu0 %v57
    %73 = vmatpush.msra.mxu0 %v56
    %74 = vmatpush.msra.mxu0 %v55
    %75 = vmatmul.f32.gmra.mxu0 %v33
    %v76 = vpop.f32.mrf.mxu0
    %v77 = vadd.f32 0.0, %v76
    %78 = vdwg.mxu0
    %v79 = vld [vmem:[%s3] sm:$0xff]
    %v80 = vld [vmem:[%s3 + $0x8] sm:$0xff]
    %v81 = vld [vmem:[%s3 + $0x10] sm:$0xff]
    %v82 = vld [vmem:[%s3 + $0x18] sm:$0xff]
    %83 = vmatpush.msra.mxu0 0.0
    %84 = vmatpush.msra.mxu0 0.0
    %85 = vmatpush.msra.mxu0 0.0
    %86 = vmatpush.msra.mxu0 0.0
    %87 = vmatpush.msra.mxu0 0.0
    %88 = vmatpush.msra.mxu0 0.0
    %89 = vmatpush.msra.mxu0 0.0
    %90 = vmatpush.msra.mxu0 0.0
    %91 = vmatpush.msra.mxu0 0.0
    %92 = vmatpush.msra.mxu0 0.0
    %93 = vmatpush.msra.mxu0 0.0
    %94 = vmatpush.msra.mxu0 0.0
    %95 = vmatpush.msra.mxu0 %v82
    %96 = vmatpush.msra.mxu0 %v81
    %97 = vmatpush.msra.mxu0 %v80
    %98 = vmatpush.msra.mxu0 %v79
    %99 = vmatmul.f32.gmra.mxu0 %v33
    %v100 = vpop.f32.mrf.mxu0
    %v101 = vadd.f32 0.0, %v100
    %102 = vdwg.mxu0
    %vm103 = vcmask 130048
    %v105 = vsel %vm103, %v53, 0
    %v108 = vsel %vm103, %v77, 0
    %110 = vmatpush.xpose.msra.mxu0 0.0
    %111 = vmatpush.xpose.msra.mxu0 0.0
    %112 = vmatpush.xpose.msra.mxu0 0.0
    %113 = vmatpush.xpose.msra.mxu0 0.0
    %114 = vmatpush.xpose.msra.mxu0 0.0
    %115 = vmatpush.xpose.msra.mxu0 0.0
    %116 = vmatpush.xpose.msra.mxu0 0.0
    %117 = vmatpush.xpose.msra.mxu0 0.0
    %118 = vmatpush.xpose.msra.mxu0 0.0
    %119 = vmatpush.xpose.msra.mxu0 0.0
    %120 = vmatpush.xpose.msra.mxu0 0.0
    %121 = vmatpush.xpose.msra.mxu0 0.0
    %122 = vmatpush.xpose.msra.mxu0 0.0
    %123 = vmatpush.xpose.msra.mxu0 0.0
    %124 = vmatpush.xpose.msra.mxu0 0.0
    %125 = vmatpush.xpose.msra.mxu0 %v108
    %126 = vmatmul.f32.gmra.mxu0 %v105
    %v127 = vpop.f32.mrf.mxu0
    %v128 = vadd.f32 0.0, %v127
    %129 = vdwg.mxu0
    %vm130 = vcmask 64512
    %v131 = vsel %vm130, %v128, -inf
    %132 = vmax.xlane.f32.xlu0 %v131
    %v133 = vpop.xlane.xlu0 %132
    %v134 = vsub.f32 %v128, %v133
    %v135 = vmul.f32 %v134, 1.442695
    %v136 = vpow.pop %v135
    %v137 = vsel %vm130, %v136, 0.0
    %138 = vadd.xlane.f32.xlu0 %v137
    %v139 = vpop.xlane.xlu0 %138
    %v140 = vrcp.pop %v139
    %v141 = vmul.f32 %v136, %v140
    %v143 = vsel %vm130, %v141, 0
    %145 = vmatpush.msra.mxu0 0.0
    %146 = vmatpush.msra.mxu0 0.0
    %147 = vmatpush.msra.mxu0 0.0
    %148 = vmatpush.msra.mxu0 0.0
    %149 = vmatpush.msra.mxu0 0.0
    %150 = vmatpush.msra.mxu0 0.0
    %151 = vmatpush.msra.mxu0 0.0
    %152 = vmatpush.msra.mxu0 0.0
    %153 = vmatpush.msra.mxu0 0.0
    %154 = vmatpush.msra.mxu0 0.0
    %155 = vmatpush.msra.mxu0 0.0
    %156 = vmatpush.msra.mxu0 0.0
    %157 = vmatpush.msra.mxu0 0.0
    %158 = vmatpush.msra.mxu0 0.0
    %159 = vmatpush.msra.mxu0 0.0
    %160 = vmatpush.msra.mxu0 %v101
    %161 = vmatmul.f32.gmra.mxu0 %v143
    %v162 = vpop.f32.mrf.mxu0
    %v163 = vadd.f32 0.0, %v162
    %164 = vdwg.mxu0
    %v165 = vld [vmem:[%s4] sm:$0xff]
    %v166 = vld [vmem:[%s4 + $0x8] sm:$0xff]
    %s167 = scalar_lea.vmem %s1, 32
    %v168 = vld [vmem:[%s167] sm:$0xff]
    %v169 = vld [vmem:[%s167 + $0x8] sm:$0xff]
    %v170 = vld [vmem:[%s167 + $0x10] sm:$0xff]
    %v171 = vld [vmem:[%s167 + $0x18] sm:$0xff]
    %172 = vmatpush.msra.mxu0 0.0
    %173 = vmatpush.msra.mxu0 0.0
    %174 = vmatpush.msra.mxu0 0.0
    %175 = vmatpush.msra.mxu0 0.0
    %176 = vmatpush.msra.mxu0 0.0
    %177 = vmatpush.msra.mxu0 0.0
    %178 = vmatpush.msra.mxu0 0.0
    %179 = vmatpush.msra.mxu0 0.0
    %180 = vmatpush.msra.mxu0 0.0
    %181 = vmatpush.msra.mxu0 0.0
    %182 = vmatpush.msra.mxu0 0.0
    %183 = vmatpush.msra.mxu0 0.0
    %184 = vmatpush.msra.mxu0 %v171
    %185 = vmatpush.msra.mxu0 %v170
    %186 = vmatpush.msra.mxu0 %v169
    %187 = vmatpush.msra.mxu0 %v168
    %188 = vmatmul.f32.gmra.mxu0 %v33
    %v189 = vpop.f32.mrf.mxu0
    %v190 = vadd.f32 0.0, %v189
    %191 = vdwg.mxu0
    %s192 = scalar_lea.vmem %s2, 32
    %v193 = vld [vmem:[%s192] sm:$0xff]
    %v194 = vld [vmem:[%s192 + $0x8] sm:$0xff]
    %v195 = vld [vmem:[%s192 + $0x10] sm:$0xff]
    %v196 = vld [vmem:[%s192 + $0x18] sm:$0xff]
    %197 = vmatpush.msra.mxu0 0.0
    %198 = vmatpush.msra.mxu0 0.0
    %199 = vmatpush.msra.mxu0 0.0
    %200 = vmatpush.msra.mxu0 0.0
    %201 = vmatpush.msra.mxu0 0.0
    %202 = vmatpush.msra.mxu0 0.0
    %203 = vmatpush.msra.mxu0 0.0
    %204 = vmatpush.msra.mxu0 0.0
    %205 = vmatpush.msra.mxu0 0.0
    %206 = vmatpush.msra.mxu0 0.0
    %207 = vmatpush.msra.mxu0 0.0
    %208 = vmatpush.msra.mxu0 0.0
    %209 = vmatpush.msra.mxu0 %v196
    %210 = vmatpush.msra.mxu0 %v195
    %211 = vmatpush.msra.mxu0 %v194
    %212 = vmatpush.msra.mxu0 %v193
    %213 = vmatmul.f32.gmra.mxu0 %v33
    %v214 = vpop.f32.mrf.mxu0
    %v215 = vadd.f32 0.0, %v214
    %216 = vdwg.mxu0
    %s217 = scalar_lea.vmem %s3, 32
    %v218 = vld [vmem:[%s217] sm:$0xff]
    %v219 = vld [vmem:[%s217 + $0x8] sm:$0xff]
    %v220 = vld [vmem:[%s217 + $0x10] sm:$0xff]
    %v221 = vld [vmem:[%s217 + $0x18] sm:$0xff]
    %222 = vmatpush.msra.mxu0 0.0
    %223 = vmatpush.msra.mxu0 0.0
    %224 = vmatpush.msra.mxu0 0.0
    %225 = vmatpush.msra.mxu0 0.0
    %226 = vmatpush.msra.mxu0 0.0
    %227 = vmatpush.msra.mxu0 0.0
    %228 = vmatpush.msra.mxu0 0.0
    %229 = vmatpush.msra.mxu0 0.0
    %230 = vmatpush.msra.mxu0 0.0
    %231 = vmatpush.msra.mxu0 0.0
    %232 = vmatpush.msra.mxu0 0.0
    %233 = vmatpush.msra.mxu0 0.0
    %234 = vmatpush.msra.mxu0 %v221
    %235 = vmatpush.msra.mxu0 %v220
    %236 = vmatpush.msra.mxu0 %v219
    %237 = vmatpush.msra.mxu0 %v218
    %238 = vmatmul.f32.gmra.mxu0 %v33
    %v239 = vpop.f32.mrf.mxu0
    %v240 = vadd.f32 0.0, %v239
    %241 = vdwg.mxu0
    %v243 = vsel %vm103, %v190, 0
    %v246 = vsel %vm103, %v215, 0
    %248 = vmatpush.xpose.msra.mxu0 0.0
    %249 = vmatpush.xpose.msra.mxu0 0.0
    %250 = vmatpush.xpose.msra.mxu0 0.0
    %251 = vmatpush.xpose.msra.mxu0 0.0
    %252 = vmatpush.xpose.msra.mxu0 0.0
    %253 = vmatpush.xpose.msra.mxu0 0.0
    %254 = vmatpush.xpose.msra.mxu0 0.0
    %255 = vmatpush.xpose.msra.mxu0 0.0
    %256 = vmatpush.xpose.msra.mxu0 0.0
    %257 = vmatpush.xpose.msra.mxu0 0.0
    %258 = vmatpush.xpose.msra.mxu0 0.0
    %259 = vmatpush.xpose.msra.mxu0 0.0
    %260 = vmatpush.xpose.msra.mxu0 0.0
    %261 = vmatpush.xpose.msra.mxu0 0.0
    %262 = vmatpush.xpose.msra.mxu0 0.0
    %263 = vmatpush.xpose.msra.mxu0 %v246
    %264 = vmatmul.f32.gmra.mxu0 %v243
    %v265 = vpop.f32.mrf.mxu0
    %v266 = vadd.f32 0.0, %v265
    %267 = vdwg.mxu0
    %v268 = vsel %vm130, %v266, -inf
    %269 = vmax.xlane.f32.xlu0 %v268
    %v270 = vpop.xlane.xlu0 %269
    %v271 = vsub.f32 %v266, %v270
    %v272 = vmul.f32 %v271, 1.442695
    %v273 = vpow.pop %v272
    %v274 = vsel %vm130, %v273, 0.0
    %275 = vadd.xlane.f32.xlu0 %v274
    %v276 = vpop.xlane.xlu0 %275
    %v277 = vrcp.pop %v276
    %v278 = vmul.f32 %v273, %v277
    %v280 = vsel %vm130, %v278, 0
    %282 = vmatpush.msra.mxu0 0.0
    %283 = vmatpush.msra.mxu0 0.0
    %284 = vmatpush.msra.mxu0 0.0
    %285 = vmatpush.msra.mxu0 0.0
    %286 = vmatpush.msra.mxu0 0.0
    %287 = vmatpush.msra.mxu0 0.0
    %288 = vmatpush.msra.mxu0 0.0
    %289 = vmatpush.msra.mxu0 0.0
    %290 = vmatpush.msra.mxu0 0.0
    %291 = vmatpush.msra.mxu0 0.0
    %292 = vmatpush.msra.mxu0 0.0
    %293 = vmatpush.msra.mxu0 0.0
    %294 = vmatpush.msra.mxu0 0.0
    %295 = vmatpush.msra.mxu0 0.0
    %296 = vmatpush.msra.mxu0 0.0
    %297 = vmatpush.msra.mxu0 %v240
    %298 = vmatmul.f32.gmra.mxu0 %v280
    %v299 = vpop.f32.mrf.mxu0
    %v300 = vadd.f32 0.0, %v299
    %301 = vdwg.mxu0
    %s302 = scalar_lea.vmem %s4, 16
    %v303 = vld [vmem:[%s302] sm:$0xff]
    %v304 = vld [vmem:[%s302 + $0x8] sm:$0xff]
    %v306 = vsel %vm103, %v300, 0
    %308 = vmatpush.msra.mxu0 0.0
    %309 = vmatpush.msra.mxu0 0.0
    %310 = vmatpush.msra.mxu0 0.0
    %311 = vmatpush.msra.mxu0 0.0
    %312 = vmatpush.msra.mxu0 0.0
    %313 = vmatpush.msra.mxu0 0.0
    %314 = vmatpush.msra.mxu0 0.0
    %315 = vmatpush.msra.mxu0 0.0
    %316 = vmatpush.msra.mxu0 0.0
    %317 = vmatpush.msra.mxu0 0.0
    %318 = vmatpush.msra.mxu0 0.0
    %319 = vmatpush.msra.mxu0 0.0
    %320 = vmatpush.msra.mxu0 0.0
    %321 = vmatpush.msra.mxu0 0.0
    %322 = vmatpush.msra.mxu0 %v304
    %323 = vmatpush.msra.mxu0 %v303
    %324 = vmatmul.f32.gmra.mxu0 %v306
    %v325 = vpop.f32.mrf.mxu0
    %v326 = vadd.f32 0.0, %v325
    %327 = vdwg.mxu0
    %v329 = vsel %vm103, %v163, 0
    %331 = vmatpush.msra.mxu0 0.0
    %332 = vmatpush.msra.mxu0 0.0
    %333 = vmatpush.msra.mxu0 0.0
    %334 = vmatpush.msra.mxu0 0.0
    %335 = vmatpush.msra.mxu0 0.0
    %336 = vmatpush.msra.mxu0 0.0
    %337 = vmatpush.msra.mxu0 0.0
    %338 = vmatpush.msra.mxu0 0.0
    %339 = vmatpush.msra.mxu0 0.0
    %340 = vmatpush.msra.mxu0 0.0
    %341 = vmatpush.msra.mxu0 0.0
    %342 = vmatpush.msra.mxu0 0.0
    %343 = vmatpush.msra.mxu0 0.0
    %344 = vmatpush.msra.mxu0 0.0
    %345 = vmatpush.msra.mxu0 %v166
    %346 = vmatpush.msra.mxu0 %v165
    %347 = vmatmul.f32.gmra.mxu0 %v329
    %v348 = vpop.f32.mrf.mxu0
    %v349 = vadd.f32 %v326, %v348
    %350 = vdwg.mxu0
    %v352 = vperm.slane %v26, 0
    %v354 = vadd.f32 %v349, %v352
    %355 = vst.msk [vmem:[#allocation2] sm:$0xff] %vm31, %v354
    %v356 = vld [vmem:[%s1] sm:$0xff]
    %v357 = vld [vmem:[%s1 + $0x8] sm:$0xff]
    %v358 = vld [vmem:[%s1 + $0x10] sm:$0xff]
    %v359 = vld [vmem:[%s1 + $0x18] sm:$0xff]
    %v361 = vsel %vm31, %v25, 0
    %363 = vmatpush.msra.mxu0 0.0
    %364 = vmatpush.msra.mxu0 0.0
    %365 = vmatpush.msra.mxu0 0.0
    %366 = vmatpush.msra.mxu0 0.0
    %367 = vmatpush.msra.mxu0 0.0
    %368 = vmatpush.msra.mxu0 0.0
    %369 = vmatpush.msra.mxu0 0.0
    %370 = vmatpush.msra.mxu0 0.0
    %371 = vmatpush.msra.mxu0 0.0
    %372 = vmatpush.msra.mxu0 0.0
    %373 = vmatpush.msra.mxu0 0.0
    %374 = vmatpush.msra.mxu0 0.0
    %375 = vmatpush.msra.mxu0 %v359
    %376 = vmatpush.msra.mxu0 %v358
    %377 = vmatpush.msra.mxu0 %v357
    %378 = vmatpush.msra.mxu0 %v356
    %379 = vmatmul.f32.gmra.mxu0 %v361
    %v380 = vpop.f32.mrf.mxu0
    %v381 = vadd.f32 0.0, %v380
    %382 = vdwg.mxu0
    %v383 = vld [vmem:[%s2] sm:$0xff]
    %v384 = vld [vmem:[%s2 + $0x8] sm:$0xff]
    %v385 = vld [vmem:[%s2 + $0x10] sm:$0xff]
    %v386 = vld [vmem:[%s2 + $0x18] sm:$0xff]
    %387 = vmatpush.msra.mxu0 0.0
    %388 = vmatpush.msra.mxu0 0.0
    %389 = vmatpush.msra.mxu0 0.0
    %390 = vmatpush.msra.mxu0 0.0
    %391 = vmatpush.msra.mxu0 0.0
    %392 = vmatpush.msra.mxu0 0.0
    %393 = vmatpush.msra.mxu0 0.0
    %394 = vmatpush.msra.mxu0 0.0
    %395 = vmatpush.msra.mxu0 0.0
    %396 = vmatpush.msra.mxu0 0.0
    %397 = vmatpush.msra.mxu0 0.0
    %398 = vmatpush.msra.mxu0 0.0
    %399 = vmatpush.msra.mxu0 %v386
    %400 = vmatpush.msra.mxu0 %v385
    %401 = vmatpush.msra.mxu0 %v384
    %402 = vmatpush.msra.mxu0 %v383
    %403 = vmatmul.f32.gmra.mxu0 %v361
    %v404 = vpop.f32.mrf.mxu0
    %v405 = vadd.f32 0.0, %v404
    %406 = vdwg.mxu0
    %v407 = vld [vmem:[%s3] sm:$0xff]
    %v408 = vld [vmem:[%s3 + $0x8] sm:$0xff]
    %v409 = vld [vmem:[%s3 + $0x10] sm:$0xff]
    %v410 = vld [vmem:[%s3 + $0x18] sm:$0xff]
    %411 = vmatpush.msra.mxu0 0.0
    %412 = vmatpush.msra.mxu0 0.0
    %413 = vmatpush.msra.mxu0 0.0
    %414 = vmatpush.msra.mxu0 0.0
    %415 = vmatpush.msra.mxu0 0.0
    %416 = vmatpush.msra.mxu0 0.0
    %417 = vmatpush.msra.mxu0 0.0
    %418 = vmatpush.msra.mxu0 0.0
    %419 = vmatpush.msra.mxu0 0.0
    %420 = vmatpush.msra.mxu0 0.0
    %421 = vmatpush.msra.mxu0 0.0
    %422 = vmatpush.msra.mxu0 0.0
    %423 = vmatpush.msra.mxu0 %v410
    %424 = vmatpush.msra.mxu0 %v409
    %425 = vmatpush.msra.mxu0 %v408
    %426 = vmatpush.msra.mxu0 %v407
    %427 = vmatmul.f32.gmra.mxu0 %v361
    %v428 = vpop.f32.mrf.mxu0
    %v429 = vadd.f32 0.0, %v428
    %430 = vdwg.mxu0
    %v432 = vsel %vm103, %v381, 0
    %v435 = vsel %vm103, %v405, 0
    %437 = vmatpush.xpose.msra.mxu0 0.0
    %438 = vmatpush.xpose.msra.mxu0 0.0
    %439 = vmatpush.xpose.msra.mxu0 0.0
    %440 = vmatpush.xpose.msra.mxu0 0.0
    %441 = vmatpush.xpose.msra.mxu0 0.0
    %442 = vmatpush.xpose.msra.mxu0 0.0
    %443 = vmatpush.xpose.msra.mxu0 0.0
    %444 = vmatpush.xpose.msra.mxu0 0.0
    %445 = vmatpush.xpose.msra.mxu0 0.0
    %446 = vmatpush.xpose.msra.mxu0 0.0
    %447 = vmatpush.xpose.msra.mxu0 0.0
    %448 = vmatpush.xpose.msra.mxu0 0.0
    %449 = vmatpush.xpose.msra.mxu0 0.0
    %450 = vmatpush.xpose.msra.mxu0 0.0
    %451 = vmatpush.xpose.msra.mxu0 0.0
    %452 = vmatpush.xpose.msra.mxu0 %v435
    %453 = vmatmul.f32.gmra.mxu0 %v432
    %v454 = vpop.f32.mrf.mxu0
    %v455 = vadd.f32 0.0, %v454
    %456 = vdwg.mxu0
    %v457 = vsel %vm130, %v455, -inf
    %458 = vmax.xlane.f32.xlu0 %v457
    %v459 = vpop.xlane.xlu0 %458
    %v460 = vsub.f32 %v455, %v459
    %v461 = vmul.f32 %v460, 1.442695
    %v462 = vpow.pop %v461
    %v463 = vsel %vm130, %v462, 0.0
    %464 = vadd.xlane.f32.xlu0 %v463
    %v465 = vpop.xlane.xlu0 %464
    %v466 = vrcp.pop %v465
    %v467 = vmul.f32 %v462, %v466
    %v469 = vsel %vm130, %v467, 0
    %471 = vmatpush.msra.mxu0 0.0
    %472 = vmatpush.msra.mxu0 0.0
    %473 = vmatpush.msra.mxu0 0.0
    %474 = vmatpush.msra.mxu0 0.0
    %475 = vmatpush.msra.mxu0 0.0
    %476 = vmatpush.msra.mxu0 0.0
    %477 = vmatpush.msra.mxu0 0.0
    %478 = vmatpush.msra.mxu0 0.0
    %479 = vmatpush.msra.mxu0 0.0
    %480 = vmatpush.msra.mxu0 0.0
    %481 = vmatpush.msra.mxu0 0.0
    %482 = vmatpush.msra.mxu0 0.0
    %483 = vmatpush.msra.mxu0 0.0
    %484 = vmatpush.msra.mxu0 0.0
    %485 = vmatpush.msra.mxu0 0.0
    %486 = vmatpush.msra.mxu0 %v429
    %487 = vmatmul.f32.gmra.mxu0 %v469
    %v488 = vpop.f32.mrf.mxu0
    %v489 = vadd.f32 0.0, %v488
    %490 = vdwg.mxu0
    %v491 = vld [vmem:[%s4] sm:$0xff]
    %v492 = vld [vmem:[%s4 + $0x8] sm:$0xff]
    %v493 = vld [vmem:[%s167] sm:$0xff]
    %v494 = vld [vmem:[%s167 + $0x8] sm:$0xff]
    %v495 = vld [vmem:[%s167 + $0x10] sm:$0xff]
    %v496 = vld [vmem:[%s167 + $0x18] sm:$0xff]
    %497 = vmatpush.msra.mxu0 0.0
    %498 = vmatpush.msra.mxu0 0.0
    %499 = vmatpush.msra.mxu0 0.0
    %500 = vmatpush.msra.mxu0 0.0
    %501 = vmatpush.msra.mxu0 0.0
    %502 = vmatpush.msra.mxu0 0.0
    %503 = vmatpush.msra.mxu0 0.0
    %504 = vmatpush.msra.mxu0 0.0
    %505 = vmatpush.msra.mxu0 0.0
    %506 = vmatpush.msra.mxu0 0.0
    %507 = vmatpush.msra.mxu0 0.0
    %508 = vmatpush.msra.mxu0 0.0
    %509 = vmatpush.msra.mxu0 %v496
    %510 = vmatpush.msra.mxu0 %v495
    %511 = vmatpush.msra.mxu0 %v494
    %512 = vmatpush.msra.mxu0 %v493
    %513 = vmatmul.f32.gmra.mxu0 %v361
    %v514 = vpop.f32.mrf.mxu0
    %v515 = vadd.f32 0.0, %v514
    %516 = vdwg.mxu0
    %v517 = vld [vmem:[%s192] sm:$0xff]
    %v518 = vld [vmem:[%s192 + $0x8] sm:$0xff]
    %v519 = vld [vmem:[%s192 + $0x10] sm:$0xff]
    %v520 = vld [vmem:[%s192 + $0x18] sm:$0xff]
    %521 = vmatpush.msra.mxu0 0.0
    %522 = vmatpush.msra.mxu0 0.0
    %523 = vmatpush.msra.mxu0 0.0
    %524 = vmatpush.msra.mxu0 0.0
    %525 = vmatpush.msra.mxu0 0.0
    %526 = vmatpush.msra.mxu0 0.0
    %527 = vmatpush.msra.mxu0 0.0
    %528 = vmatpush.msra.mxu0 0.0
    %529 = vmatpush.msra.mxu0 0.0
    %530 = vmatpush.msra.mxu0 0.0
    %531 = vmatpush.msra.mxu0 0.0
    %532 = vmatpush.msra.mxu0 0.0
    %533 = vmatpush.msra.mxu0 %v520
    %534 = vmatpush.msra.mxu0 %v519
    %535 = vmatpush.msra.mxu0 %v518
    %536 = vmatpush.msra.mxu0 %v517
    %537 = vmatmul.f32.gmra.mxu0 %v361
    %v538 = vpop.f32.mrf.mxu0
    %v539 = vadd.f32 0.0, %v538
    %540 = vdwg.mxu0
    %v541 = vld [vmem:[%s217] sm:$0xff]
    %v542 = vld [vmem:[%s217 + $0x8] sm:$0xff]
    %v543 = vld [vmem:[%s217 + $0x10] sm:$0xff]
    %v544 = vld [vmem:[%s217 + $0x18] sm:$0xff]
    %545 = vmatpush.msra.mxu0 0.0
    %546 = vmatpush.msra.mxu0 0.0
    %547 = vmatpush.msra.mxu0 0.0
    %548 = vmatpush.msra.mxu0 0.0
    %549 = vmatpush.msra.mxu0 0.0
    %550 = vmatpush.msra.mxu0 0.0
    %551 = vmatpush.msra.mxu0 0.0
    %552 = vmatpush.msra.mxu0 0.0
    %553 = vmatpush.msra.mxu0 0.0
    %554 = vmatpush.msra.mxu0 0.0
    %555 = vmatpush.msra.mxu0 0.0
    %556 = vmatpush.msra.mxu0 0.0
    %557 = vmatpush.msra.mxu0 %v544
    %558 = vmatpush.msra.mxu0 %v543
    %559 = vmatpush.msra.mxu0 %v542
    %560 = vmatpush.msra.mxu0 %v541
    %561 = vmatmul.f32.gmra.mxu0 %v361
    %v562 = vpop.f32.mrf.mxu0
    %v563 = vadd.f32 0.0, %v562
    %564 = vdwg.mxu0
    %v566 = vsel %vm103, %v515, 0
    %v569 = vsel %vm103, %v539, 0
    %571 = vmatpush.xpose.msra.mxu0 0.0
    %572 = vmatpush.xpose.msra.mxu0 0.0
    %573 = vmatpush.xpose.msra.mxu0 0.0
    %574 = vmatpush.xpose.msra.mxu0 0.0
    %575 = vmatpush.xpose.msra.mxu0 0.0
    %576 = vmatpush.xpose.msra.mxu0 0.0
    %577 = vmatpush.xpose.msra.mxu0 0.0
    %578 = vmatpush.xpose.msra.mxu0 0.0
    %579 = vmatpush.xpose.msra.mxu0 0.0
    %580 = vmatpush.xpose.msra.mxu0 0.0
    %581 = vmatpush.xpose.msra.mxu0 0.0
    %582 = vmatpush.xpose.msra.mxu0 0.0
    %583 = vmatpush.xpose.msra.mxu0 0.0
    %584 = vmatpush.xpose.msra.mxu0 0.0
    %585 = vmatpush.xpose.msra.mxu0 0.0
    %586 = vmatpush.xpose.msra.mxu0 %v569
    %587 = vmatmul.f32.gmra.mxu0 %v566
    %v588 = vpop.f32.mrf.mxu0
    %v589 = vadd.f32 0.0, %v588
    %590 = vdwg.mxu0
    %v591 = vsel %vm130, %v589, -inf
    %592 = vmax.xlane.f32.xlu0 %v591
    %v593 = vpop.xlane.xlu0 %592
    %v594 = vsub.f32 %v589, %v593
    %v595 = vmul.f32 %v594, 1.442695
    %v596 = vpow.pop %v595
    %v597 = vsel %vm130, %v596, 0.0
    %598 = vadd.xlane.f32.xlu0 %v597
    %v599 = vpop.xlane.xlu0 %598
    %v600 = vrcp.pop %v599
    %v601 = vmul.f32 %v596, %v600
    %v603 = vsel %vm130, %v601, 0
    %605 = vmatpush.msra.mxu0 0.0
    %606 = vmatpush.msra.mxu0 0.0
    %607 = vmatpush.msra.mxu0 0.0
    %608 = vmatpush.msra.mxu0 0.0
    %609 = vmatpush.msra.mxu0 0.0
    %610 = vmatpush.msra.mxu0 0.0
    %611 = vmatpush.msra.mxu0 0.0
    %612 = vmatpush.msra.mxu0 0.0
    %613 = vmatpush.msra.mxu0 0.0
    %614 = vmatpush.msra.mxu0 0.0
    %615 = vmatpush.msra.mxu0 0.0
    %616 = vmatpush.msra.mxu0 0.0
    %617 = vmatpush.msra.mxu0 0.0
    %618 = vmatpush.msra.mxu0 0.0
    %619 = vmatpush.msra.mxu0 0.0
    %620 = vmatpush.msra.mxu0 %v563
    %621 = vmatmul.f32.gmra.mxu0 %v603
    %v622 = vpop.f32.mrf.mxu0
    %v623 = vadd.f32 0.0, %v622
    %624 = vdwg.mxu0
    %v625 = vld [vmem:[%s302] sm:$0xff]
    %v626 = vld [vmem:[%s302 + $0x8] sm:$0xff]
    %v628 = vsel %vm103, %v623, 0
    %630 = vmatpush.msra.mxu0 0.0
    %631 = vmatpush.msra.mxu0 0.0
    %632 = vmatpush.msra.mxu0 0.0
    %633 = vmatpush.msra.mxu0 0.0
    %634 = vmatpush.msra.mxu0 0.0
    %635 = vmatpush.msra.mxu0 0.0
    %636 = vmatpush.msra.mxu0 0.0
    %637 = vmatpush.msra.mxu0 0.0
    %638 = vmatpush.msra.mxu0 0.0
    %639 = vmatpush.msra.mxu0 0.0
    %640 = vmatpush.msra.mxu0 0.0
    %641 = vmatpush.msra.mxu0 0.0
    %642 = vmatpush.msra.mxu0 0.0
    %643 = vmatpush.msra.mxu0 0.0
    %644 = vmatpush.msra.mxu0 %v626
    %645 = vmatpush.msra.mxu0 %v625
    %646 = vmatmul.f32.gmra.mxu0 %v628
    %v647 = vpop.f32.mrf.mxu0
    %v648 = vadd.f32 0.0, %v647
    %649 = vdwg.mxu0
    %v651 = vsel %vm103, %v489, 0
    %653 = vmatpush.msra.mxu0 0.0
    %654 = vmatpush.msra.mxu0 0.0
    %655 = vmatpush.msra.mxu0 0.0
    %656 = vmatpush.msra.mxu0 0.0
    %657 = vmatpush.msra.mxu0 0.0
    %658 = vmatpush.msra.mxu0 0.0
    %659 = vmatpush.msra.mxu0 0.0
    %660 = vmatpush.msra.mxu0 0.0
    %661 = vmatpush.msra.mxu0 0.0
    %662 = vmatpush.msra.mxu0 0.0
    %663 = vmatpush.msra.mxu0 0.0
    %664 = vmatpush.msra.mxu0 0.0
    %665 = vmatpush.msra.mxu0 0.0
    %666 = vmatpush.msra.mxu0 0.0
    %667 = vmatpush.msra.mxu0 %v492
    %668 = vmatpush.msra.mxu0 %v491
    %669 = vmatmul.f32.gmra.mxu0 %v651
    %v670 = vpop.f32.mrf.mxu0
    %v671 = vadd.f32 %v648, %v670
    %672 = vdwg.mxu0
    %v673 = vadd.f32 %v671, %v352
    %674 = vst.msk [vmem:[#allocation2 + $0x8] sm:$0xff] %vm31, %v673
    // Predicated region
    $region26: #{self_attention.1} parent=1 // pred_check
      _
    $region27: #{self_attention.1} parent=1 // pred_check_branch
      %676 = sbr.rel (0) target = $region29
    $region28: #{self_attention.1} parent=1 // pred_region
      %678 = vsyncadd [#allocation3], 0
      %s679 = sshll.u32 [#allocation2], 4
      %s680 = int_to_ptr.vmem [resolvable:$true] %s679
      %s681 = sshll.u32 %s6, 4
      %s682 = int_to_ptr.hbm [resolvable:$true] %s681
      %687 = dma.vmem_to_hbm [thread:$0]  %s680, 256, %s682, [#allocation3], 128, 128, 8
    $region29: #{self_attention.1} parent=1 // pred_fallthru
      _
    // Predicated region
    $region30: #{self_attention.1} parent=1 // pred_check
      _
    $region31: #{self_attention.1} parent=1 // pred_check_branch
      %689 = sbr.rel (0) target = $region33
    $region32: #{self_attention.1} parent=1 // pred_region
      %691 = dma.done [#allocation3], 256
    $region33: #{self_attention.1} parent=1 // pred_fallthru
      _
    %692 = vsyncpa [#allocation3], 1

</llo_original>
